<compile_context>
chip_gen: v6e
topology: v6e:2x2x1
jax: 0.10.0
libtpu: 0.0.40
codegen_flags: <defaults>
</compile_context>

<pallas_src>
import functools

import jax
import jax.numpy as jnp
from jax.experimental import pallas as pl
from jax.experimental.pallas import tpu as pltpu

# ----- config constants (cfg.MODEL.*) -----
NUM_OBJ_CLASSES = 64   # cfg.MODEL.ROI_BOX_HEAD.NUM_CLASSES
NUM_REL_CLASSES = 32   # cfg.MODEL.ROI_RELATION_HEAD.NUM_CLASSES
LAMBDA = 0.65          # cfg.MODEL.RANDOM_LAMBDA == False


def _round_up(x, m):
    return ((x + m - 1) // m) * m


# ---------------- Pallas kernel ----------------
def _cumix_mix_kernel(x1_ref, x2_ref, x3_ref, alpha_ref, o_ref):
    # x*_ref: (TR, W) f32 in VMEM; alpha_ref: (TR, 1) f32 with values in {0, 1}.
    # out = LAMBDA * x1 + (1 - LAMBDA) * select(alpha, x2, x3)
    a = alpha_ref[...]                                     # (TR, 1) -> lane broadcast
    mix23 = jnp.where(a > 0.5, x2_ref[...], x3_ref[...])   # single vselect per elem
    o_ref[...] = LAMBDA * x1_ref[...] + (1.0 - LAMBDA) * mix23


def pallas_cumix_mix(x1, x2, x3, alpha, max_tile_rows=512):
    """Fused mix over the lane-concatenated slab.

    out[r] = LAMBDA * x1[r] + (1 - LAMBDA) * (x2[r] if alpha[r] else x3[r])
    """
    P, W = x1.shape
    assert W % 128 == 0, "slab width must be lane-dense (multiple of 128)"

    # One big row tile for small batches; cap at 512 rows so per-buffer tiles
    # stay ~1.5 MiB (512 x 768 x 4B) -> well inside v7x's 64 MiB VMEM even with
    # 3 inputs + 1 output double-buffered.
    tile_rows = min(_round_up(P, 8), max_tile_rows)
    p_pad = _round_up(P, tile_rows)
    if p_pad != P:
        row_pad = ((0, p_pad - P), (0, 0))
        x1 = jnp.pad(x1, row_pad)
        x2 = jnp.pad(x2, row_pad)
        x3 = jnp.pad(x3, row_pad)
        alpha = jnp.pad(alpha, row_pad)

    grid = (p_pad // tile_rows,)
    out = pl.pallas_call(
        _cumix_mix_kernel,
        out_shape=jax.ShapeDtypeStruct((p_pad, W), jnp.float32),
        grid=grid,
        in_specs=[
            pl.BlockSpec((tile_rows, W), lambda i: (i, 0)),   # x1
            pl.BlockSpec((tile_rows, W), lambda i: (i, 0)),   # x2
            pl.BlockSpec((tile_rows, W), lambda i: (i, 0)),   # x3
            pl.BlockSpec((tile_rows, 1), lambda i: (i, 0)),   # alpha
        ],
        out_specs=pl.BlockSpec((tile_rows, W), lambda i: (i, 0)),
        compiler_params=pltpu.CompilerParams(
            dimension_semantics=("parallel",),
        ),
    )(x1, x2, x3, alpha)
    return out[:P]


# ---------------- forward (glue + single fused kernel call) ----------------
def cumix_head_forward(sub, sub_l, obj, obj_l, prd, prd_l, prd_weights, rng_key,
                       use_pallas=True):
    bs = prd.shape[0]
    d = sub.shape[1]

    # probs = prd_weights[prd_labels]; indices = argsort(-probs)
    probs = prd_weights[prd_l]
    indices = jnp.argsort(-probs)

    # AUG_PERCENT == 50
    partition_num = bs // 2
    idx1 = indices[:partition_num]
    k_perm, k_alpha = jax.random.split(rng_key)
    idx2 = jax.random.permutation(k_perm, idx1)     # np.random.permutation(indices_1)
    idx3 = indices[partition_num:2 * partition_num]

    # alpha1 = torch.randint(0, 2, [P, 1])
    alpha = jax.random.randint(k_alpha, (partition_num, 1), 0, 2).astype(jnp.float32)

    # create_one_hot, built directly at 128-lane padded width (extra columns are
    # always zero since labels < num_classes; sliced back after the kernel).
    obj_cls_pad = _round_up(NUM_OBJ_CLASSES, 128)
    rel_cls_pad = _round_up(NUM_REL_CLASSES, 128)
    sub_oh = jax.nn.one_hot(sub_l, obj_cls_pad, dtype=jnp.float32)
    obj_oh = jax.nn.one_hot(obj_l, obj_cls_pad, dtype=jnp.float32)
    prd_oh = jax.nn.one_hot(prd_l, rel_cls_pad, dtype=jnp.float32)

    # Lane-concatenate everything that shares the same mix into one slab.
    slab = jnp.concatenate([sub, obj, prd, sub_oh, obj_oh, prd_oh], axis=1)
    w = slab.shape[1]
    w_pad = _round_up(w, 128)
    if w_pad != w:
        slab = jnp.pad(slab, ((0, 0), (0, w_pad - w)))

    # Row gathers (3 total, fused by XLA into the surrounding jit).
    x1 = slab[idx1]
    x2 = slab[idx2]
    x3 = slab[idx3]

    if use_pallas:
        mixed = pallas_cumix_mix(x1, x2, x3, alpha)
    else:
        # pure-JAX reference (identical math; alpha in {0,1} so exact)
        mixed = LAMBDA * x1 + (1.0 - LAMBDA) * (alpha * x2 + (1.0 - alpha) * x3)

    # Split the slab back into the six outputs (original, unpadded widths).
    off = 0
    mixed_sbj_embeddings = mixed[:, off:off + d]; off += d
    mixed_obj_embeddings = mixed[:, off:off + d]; off += d
    mixed_prd_embeddings = mixed[:, off:off + d]; off += d
    mixed_sbj_labels = mixed[:, off:off + NUM_OBJ_CLASSES]; off += obj_cls_pad
    mixed_obj_labels = mixed[:, off:off + NUM_OBJ_CLASSES]; off += obj_cls_pad
    mixed_prd_labels = mixed[:, off:off + NUM_REL_CLASSES]; off += rel_cls_pad

    return (mixed_sbj_embeddings, mixed_sbj_labels,
            mixed_obj_embeddings, mixed_obj_labels,
            mixed_prd_embeddings, mixed_prd_labels)


if __name__ == "__main__":
    key = jax.random.PRNGKey(0)
    ks = jax.random.split(key, 8)

    N, D = 16, 128  # batch of relation proposals, embedding dim
    sub = jax.random.normal(ks[0], (N, D), dtype=jnp.float32)
    obj = jax.random.normal(ks[1], (N, D), dtype=jnp.float32)
    prd = jax.random.normal(ks[2], (N, D), dtype=jnp.float32)
    sub_l = jax.random.randint(ks[3], (N,), 0, NUM_OBJ_CLASSES)
    obj_l = jax.random.randint(ks[4], (N,), 0, NUM_OBJ_CLASSES)
    prd_l = jax.random.randint(ks[5], (N,), 0, NUM_REL_CLASSES)
    prd_weights = jax.random.uniform(ks[6], (NUM_REL_CLASSES,), dtype=jnp.float32)

    fwd = jax.jit(functools.partial(cumix_head_forward),
                  static_argnames=("use_pallas",))

    outs = fwd(sub, sub_l, obj, obj_l, prd, prd_l, prd_weights, ks[7],
               use_pallas=True)
    outs = jax.block_until_ready(outs)

    # sanity check against a pure-JAX reference of the same forward
    refs = fwd(sub, sub_l, obj, obj_l, prd, prd_l, prd_weights, ks[7],
               use_pallas=False)
    refs = jax.block_until_ready(refs)
    for o, r in zip(outs, refs):
        assert o.shape == r.shape and o.dtype == r.dtype
        assert jnp.allclose(o, r, atol=1e-5, rtol=1e-5), "mismatch vs reference"

    print("KERNEL_OK")
</pallas_src>

<mosaic_0001>
module attributes {stable_mosaic.version = 11 : i64} {
  func.func @_cumix_mix_kernel(%arg0: i32, %arg1: memref<8x768xf32, #tpu.memory_space<vmem>>, %arg2: memref<8x768xf32, #tpu.memory_space<vmem>>, %arg3: memref<8x768xf32, #tpu.memory_space<vmem>>, %arg4: memref<8x1xf32, #tpu.memory_space<vmem>>, %arg5: memref<8x768xf32, #tpu.memory_space<vmem>>) attributes {dimension_semantics = [#tpu.dimension_semantics<parallel>], iteration_bounds = array<i64: 1>, scalar_prefetch = 0 : i64, scratch_operands = 0 : i64, tpu.core_type = #tpu.core_type<tc>, window_params = [{transform_indices = @transform_0, window_bounds = array<i64: 8, 768>}, {transform_indices = @transform_1, window_bounds = array<i64: 8, 768>}, {transform_indices = @transform_2, window_bounds = array<i64: 8, 768>}, {transform_indices = @transform_3, window_bounds = array<i64: 8, 1>}, {transform_indices = @transform_4, window_bounds = array<i64: 8, 768>}]} {
    %c0 = arith.constant 0 : index
    %c0_0 = arith.constant 0 : index
    %0 = vector.load %arg4[%c0, %c0_0] : memref<8x1xf32, #tpu.memory_space<vmem>>, vector<8x1xf32>
    %cst = arith.constant 5.000000e-01 : f32
    %1 = vector.broadcast %cst : f32 to vector<8x1xf32>
    %2 = arith.cmpf ogt, %0, %1 : vector<8x1xf32>
    %c0_1 = arith.constant 0 : index
    %c0_2 = arith.constant 0 : index
    %3 = vector.load %arg2[%c0_1, %c0_2] : memref<8x768xf32, #tpu.memory_space<vmem>>, vector<8x768xf32>
    %c0_3 = arith.constant 0 : index
    %c0_4 = arith.constant 0 : index
    %4 = vector.load %arg3[%c0_3, %c0_4] : memref<8x768xf32, #tpu.memory_space<vmem>>, vector<8x768xf32>
    %5 = vector.shape_cast %2 : vector<8x1xi1> to vector<8x1xi1>
    %6 = vector.broadcast %5 : vector<8x1xi1> to vector<8x768xi1>
    %7 = arith.select %6, %3, %4 : vector<8x768xi1>, vector<8x768xf32>
    %c0_5 = arith.constant 0 : index
    %c0_6 = arith.constant 0 : index
    %8 = vector.load %arg1[%c0_5, %c0_6] : memref<8x768xf32, #tpu.memory_space<vmem>>, vector<8x768xf32>
    %cst_7 = arith.constant 6.500000e-01 : f32
    %9 = vector.broadcast %cst_7 : f32 to vector<8x768xf32>
    %10 = arith.mulf %9, %8 : vector<8x768xf32>
    %cst_8 = arith.constant 3.500000e-01 : f32
    %11 = vector.broadcast %cst_8 : f32 to vector<8x768xf32>
    %12 = arith.mulf %11, %7 : vector<8x768xf32>
    %13 = arith.addf %10, %12 : vector<8x768xf32>
    %c0_9 = arith.constant 0 : index
    %c0_10 = arith.constant 0 : index
    %14 = vector.load %arg5[%c0_9, %c0_10] : memref<8x768xf32, #tpu.memory_space<vmem>>, vector<8x768xf32>
    tpu.vector_store %arg5[%c0_9, %c0_10], %13 {strides = array<i32>} : memref<8x768xf32, #tpu.memory_space<vmem>>, vector<8x768xf32>,
    return
  }
  func.func @transform_0(%arg0: i32) -> (i32, i32) {
    %c0_i32 = arith.constant 0 : i32
    %c0_i32_0 = arith.constant 0 : i32
    return %arg0, %c0_i32 : i32, i32
  }
  func.func @transform_1(%arg0: i32) -> (i32, i32) {
    %c0_i32 = arith.constant 0 : i32
    %c0_i32_0 = arith.constant 0 : i32
    return %arg0, %c0_i32 : i32, i32
  }
  func.func @transform_2(%arg0: i32) -> (i32, i32) {
    %c0_i32 = arith.constant 0 : i32
    %c0_i32_0 = arith.constant 0 : i32
    return %arg0, %c0_i32 : i32, i32
  }
  func.func @transform_3(%arg0: i32) -> (i32, i32) {
    %c0_i32 = arith.constant 0 : i32
    %c0_i32_0 = arith.constant 0 : i32
    return %arg0, %c0_i32 : i32, i32
  }
  func.func @transform_4(%arg0: i32) -> (i32, i32) {
    %c0_i32 = arith.constant 0 : i32
    %c0_i32_0 = arith.constant 0 : i32
    return %arg0, %c0_i32 : i32, i32
  }
}

</mosaic_0001>

<llo_original>
// kernel: neg.1
$region0: #{neg.1}
  #allocation0 [shape = 's32[1]{0}', space=sflag, size = 0x4, scoped, tag = 'scoped memory for neg.1']
  %s0 = inlined_call_operand.vmem [shape: f32[16], index: 0, kind: input, shape index: {}]
  %s1 = inlined_call_operand.vmem [shape: f32[16], index: 1, kind: output, shape index: {}]
  %v2 = vld [vmem:[%s0] sm:$0x1]
  %3 = xla_tuple %v2
  %4 = xla_tuple %3
  %v5 = vxor.u32 %v2, 2147483648
  %6 = xla_tuple %v5
  %7 = vst [vmem:[%s1] sm:$0x1] %v5

// kernel: cumix_head_forward.1
$region0: #{cumix_head_forward.1}
  #allocation0 [shape = 'u32[]', space=smem, size = 0x4, offset = 0x4, fixed_abs, tag = 'smem constant byte address 0x4 - core index']
  #allocation1 [shape = 'u32[144,128]{1,0:T(1,128)}', space=vmem, size = 0x12000, scoped, tag = 'internal scratch']
  %s0 = inlined_call_operand.vmem [shape: f32[8,768], index: 0, kind: input, shape index: {}]
  %s1 = inlined_call_operand.vmem [shape: f32[8,768], index: 1, kind: input, shape index: {}]
  %s2 = inlined_call_operand.vmem [shape: f32[8,768], index: 2, kind: input, shape index: {}]
  %s3 = inlined_call_operand.vmem [shape: f32[8,1], index: 3, kind: input, shape index: {}]
  %s4 = inlined_call_operand.vmem [shape: f32[8,768], index: 4, kind: output, shape index: {}]
  %s5 = sld [smem:[#allocation0]]
  $region26: #{cumix_head_forward.1} parent=0
    _
  %s7 = ssub.s32 1, %s5
  %s8 = scalar_select 0, %s7, %s5
  // Predicated region
  $region2: #{cumix_head_forward.1} parent=0 // pred_check
    _
  $region3: #{cumix_head_forward.1} parent=0 // pred_check_branch
    %10 = sbr.rel (0) target = $region5
  $region4: #{cumix_head_forward.1} parent=0 // pred_region
    _
  $region5: #{cumix_head_forward.1} parent=0 // pred_fallthru
    _
  // Predicated region
  $region6: #{cumix_head_forward.1} parent=0 // pred_check
    _
  $region7: #{cumix_head_forward.1} parent=0 // pred_check_branch
    %12 = sbr.rel (0) target = $region9
  $region8: #{cumix_head_forward.1} parent=0 // pred_region
    _
  $region9: #{cumix_head_forward.1} parent=0 // pred_fallthru
    _
  // Predicated region
  $region10: #{cumix_head_forward.1} parent=0 // pred_check
    _
  $region11: #{cumix_head_forward.1} parent=0 // pred_check_branch
    %14 = sbr.rel (0) target = $region13
  $region12: #{cumix_head_forward.1} parent=0 // pred_region
    _
  $region13: #{cumix_head_forward.1} parent=0 // pred_fallthru
    _
  // Predicated region
  $region14: #{cumix_head_forward.1} parent=0 // pred_check
    _
  $region15: #{cumix_head_forward.1} parent=0 // pred_check_branch
    %16 = sbr.rel (0) target = $region17
  $region16: #{cumix_head_forward.1} parent=0 // pred_region
    _
  $region17: #{cumix_head_forward.1} parent=0 // pred_fallthru
    _
  %v17 = vld [vmem:[%s3] sm:$0xff]
  %vm18 = vcmp.gt.f32.partialorder %v17, 0.5
  %v19 = vld [vmem:[%s1] sm:$0xff]
  %v20 = vld [vmem:[%s1 + $0x8] sm:$0xff]
  %v21 = vld [vmem:[%s1 + $0x10] sm:$0xff]
  %v22 = vld [vmem:[%s1 + $0x18] sm:$0xff]
  %v23 = vld [vmem:[%s1 + $0x20] sm:$0xff]
  %v24 = vld [vmem:[%s1 + $0x28] sm:$0xff]
  %v25 = vld [vmem:[%s2] sm:$0xff]
  %v26 = vld [vmem:[%s2 + $0x8] sm:$0xff]
  %v27 = vld [vmem:[%s2 + $0x10] sm:$0xff]
  %v28 = vld [vmem:[%s2 + $0x18] sm:$0xff]
  %v29 = vld [vmem:[%s2 + $0x20] sm:$0xff]
  %v30 = vld [vmem:[%s2 + $0x28] sm:$0xff]
  %v31 = vsel %vm18, 1, 0
  %32 = vset.pattern.permute.xlu0 0
  %33 = vperm.xlu0 %32, %v31
  %v34 = vpop.permute.xlu0 %33
  %vm35 = vcmp.eq.s32.totalorder %v34, 1
  %v36 = vsel %vm35, %v19, %v25
  %v37 = vsel %vm35, %v20, %v26
  %v38 = vsel %vm35, %v21, %v27
  %v39 = vsel %vm35, %v22, %v28
  %v40 = vsel %vm35, %v23, %v29
  %v41 = vsel %vm35, %v24, %v30
  %v42 = vld [vmem:[%s0] sm:$0xff]
  %v43 = vld [vmem:[%s0 + $0x8] sm:$0xff]
  %v44 = vld [vmem:[%s0 + $0x10] sm:$0xff]
  %v45 = vld [vmem:[%s0 + $0x18] sm:$0xff]
  %v46 = vld [vmem:[%s0 + $0x20] sm:$0xff]
  %v47 = vld [vmem:[%s0 + $0x28] sm:$0xff]
  %v48 = vmul.f32 %v42, 0.65
  %v49 = vmul.f32 %v43, 0.65
  %v50 = vmul.f32 %v44, 0.65
  %v51 = vmul.f32 %v45, 0.65
  %v52 = vmul.f32 %v46, 0.65
  %v53 = vmul.f32 %v47, 0.65
  %v54 = vmul.f32 %v36, 0.35
  %v55 = vmul.f32 %v37, 0.35
  %v56 = vmul.f32 %v38, 0.35
  %v57 = vmul.f32 %v39, 0.35
  %v58 = vmul.f32 %v40, 0.35
  %v59 = vmul.f32 %v41, 0.35
  %v60 = vadd.f32 %v48, %v54
  %v61 = vadd.f32 %v49, %v55
  %v62 = vadd.f32 %v50, %v56
  %v63 = vadd.f32 %v51, %v57
  %v64 = vadd.f32 %v52, %v58
  %v65 = vadd.f32 %v53, %v59
  %66 = vst [vmem:[%s4] sm:$0xff] %v60
  %67 = vst [vmem:[%s4 + $0x8] sm:$0xff] %v61
  %68 = vst [vmem:[%s4 + $0x10] sm:$0xff] %v62
  %69 = vst [vmem:[%s4 + $0x18] sm:$0xff] %v63
  %70 = vst [vmem:[%s4 + $0x20] sm:$0xff] %v64
  %71 = vst [vmem:[%s4 + $0x28] sm:$0xff] %v65
  // Predicated region
  $region18: #{cumix_head_forward.1} parent=0 // pred_check
    _
  $region19: #{cumix_head_forward.1} parent=0 // pred_check_branch
    %73 = sbr.rel (0) target = $region21
  $region20: #{cumix_head_forward.1} parent=0 // pred_region
    _
  $region21: #{cumix_head_forward.1} parent=0 // pred_fallthru
    _
  // Predicated region
  $region22: #{cumix_head_forward.1} parent=0 // pred_check
    _
  $region23: #{cumix_head_forward.1} parent=0 // pred_check_branch
    %75 = sbr.rel (0) target = $region25
  $region24: #{cumix_head_forward.1} parent=0 // pred_region
    _
  $region25: #{cumix_head_forward.1} parent=0 // pred_fallthru
    _

</llo_original>
